<compile_context>
chip_gen: v7x
topology: tpu7x:2x2x1
jax: 0.10.0
libtpu: 0.0.40
codegen_flags: <defaults>
</compile_context>

<pallas_src>
import functools

import jax
import jax.numpy as jnp
from jax.experimental import pallas as pl
from jax.experimental.pallas import tpu as pltpu


def mlp_kernel(x_ref, w1_ref, b1_ref, w2_ref, b2_ref, w3_ref, b3_ref, o_ref,
               *, chunk):
    tb = x_ref.shape[0]
    n_chunks = tb // chunk

    # Weights / biases: loaded once per grid step, reused for every chunk.
    w1 = w1_ref[...]          # (64, 10)  native PyTorch (out, in) layout
    b1 = b1_ref[...]          # (64, 1)   broadcasts along lanes (batch)
    w2 = w2_ref[...]          # (32, 64)
    b2 = b2_ref[...]          # (32, 1)
    w3 = w3_ref[...]          # (1, 32)
    b3 = b3_ref[0]            # scalar bias from SMEM

    def body(c, carry):
        start = pl.multiple_of(c * chunk, chunk)
        x_c = x_ref[pl.ds(start, chunk), :]                      # (chunk, 10)

        # fc1 + ReLU: contract the 10-feature axes -> (64, chunk).
        # Batch ends up on the LANE axis for the rest of the pipeline.
        h1 = jax.lax.dot_general(
            w1, x_c,
            dimension_numbers=(((1,), (1,)), ((), ())),
            preferred_element_type=jnp.float32)                  # (64, chunk)
        h1 = jnp.maximum(h1 + b1, 0.0)

        # fc2 + ReLU: (32, 64) @ (64, chunk) -> (32, chunk), MXU-native.
        h2 = jnp.dot(w2, h1, preferred_element_type=jnp.float32)
        h2 = jnp.maximum(h2 + b2, 0.0)

        # fc3: (1, 32) @ (32, chunk) -> (1, chunk); lane-dense store.
        h3 = jnp.dot(w3, h2, preferred_element_type=jnp.float32) + b3
        o_ref[:, pl.ds(start, chunk)] = h3.astype(o_ref.dtype)
        return carry

    jax.lax.fori_loop(0, n_chunks, body, 0, unroll=True)


def prepare_params(params):
    """Hoist all layout massaging out of the per-call path (done once)."""
    return {
        "w1": jnp.asarray(params["w1"], jnp.float32),             # (64, 10)
        "b1": jnp.asarray(params["b1"], jnp.float32)[:, None],    # (64, 1)
        "w2": jnp.asarray(params["w2"], jnp.float32),             # (32, 64)
        "b2": jnp.asarray(params["b2"], jnp.float32)[:, None],    # (32, 1)
        "w3": jnp.asarray(params["w3"], jnp.float32),             # (1, 32)
        "b3": jnp.asarray(params["b3"], jnp.float32).reshape(1),  # (1,) -> SMEM
    }


def _round_up(n, m):
    return (n + m - 1) // m * m


@functools.partial(jax.jit, static_argnames=("tile_b",))
def simple_nn_forward(x, prepped, *, tile_b=4096):
    batch, in_features = x.shape

    # Batch tile: batch maps to the output LANE axis, so keep it a multiple of
    # 128.  Cap at tile_b; split into >=2 grid steps when the batch allows it
    # so both TensorCores get work on v7x.
    padded128 = _round_up(batch, 128)
    tb = _round_up(min(tile_b, padded128), 128)
    if tb == padded128 and padded128 >= 256:
        tb = _round_up(padded128 // 2, 128)
    padded_batch = _round_up(padded128, tb)

    if padded_batch != batch:
        x = jnp.pad(x, ((0, padded_batch - batch), (0, 0)))
    num_tiles = padded_batch // tb

    # In-kernel lane chunk: keeps h1/h2 in vregs instead of round-tripping
    # through VMEM.  tb is always a multiple of 128, so a divisor exists.
    chunk = tb
    for cand in (512, 256, 128):
        if tb % cand == 0:
            chunk = cand
            break

    # Advisory cost estimate for XLA's scheduler around the custom call.
    weight_bytes = 4 * (64 * in_features + 64 + 32 * 64 + 32 + 32 + 1)
    cost = pl.CostEstimate(
        flops=2 * padded_batch * (in_features * 64 + 64 * 32 + 32 * 1),
        transcendentals=0,
        bytes_accessed=4 * padded_batch * (in_features + 1) + weight_bytes,
    )

    # VMEM budget: x tile pads to 128 lanes (~512 B/row/buffer), output tile
    # pads to 8 sublanes; only raise the scoped limit if a big tile needs it
    # (v5e's default is 16 MiB).
    vmem_bytes = 2 * tb * 128 * 4 + 2 * 8 * tb * 4 + (2 << 20)
    cp_kwargs = dict(dimension_semantics=("parallel",))
    if vmem_bytes > (16 << 20):
        cp_kwargs["vmem_limit_bytes"] = int(min(vmem_bytes, 100 << 20))

    out = pl.pallas_call(
        functools.partial(mlp_kernel, chunk=chunk),
        out_shape=jax.ShapeDtypeStruct((1, padded_batch), x.dtype),
        grid=(num_tiles,),
        in_specs=[
            # x: batch-tiled, double-buffered HBM->VMEM per grid step.
            pl.BlockSpec((tb, in_features), lambda i: (i, 0)),
            # Weights / biases: constant block index -> VMEM-resident.
            pl.BlockSpec((64, in_features), lambda i: (0, 0)),
            pl.BlockSpec((64, 1), lambda i: (0, 0)),
            pl.BlockSpec((32, 64), lambda i: (0, 0)),
            pl.BlockSpec((32, 1), lambda i: (0, 0)),
            pl.BlockSpec((1, 32), lambda i: (0, 0)),
            # b3 scalar in SMEM (avoids a padded (8,128) VMEM tile).
            pl.BlockSpec(memory_space=pltpu.MemorySpace.SMEM),
        ],
        # Lane-dense output: batch on the lane axis, one 128-multiple tile
        # per grid step.
        out_specs=pl.BlockSpec((1, tb), lambda i: (0, i)),
        compiler_params=pltpu.CompilerParams(**cp_kwargs),
        cost_estimate=cost,
    )(x, prepped["w1"], prepped["b1"], prepped["w2"], prepped["b2"],
      prepped["w3"], prepped["b3"])

    # (1, padded_batch) -> (batch, 1), dropping pad columns.
    return out[0, :batch][:, None]


def init_params(key):
    """Deterministic init matching nn.Linear default (uniform(+-1/sqrt(fan_in)))."""
    ks = jax.random.split(key, 6)

    def lin(kw, kb, fan_in, fan_out):
        bound = 1.0 / jnp.sqrt(fan_in)
        w = jax.random.uniform(kw, (fan_out, fan_in), jnp.float32, -bound, bound)
        b = jax.random.uniform(kb, (fan_out,), jnp.float32, -bound, bound)
        return w, b

    w1, b1 = lin(ks[0], ks[1], 10, 64)
    w2, b2 = lin(ks[2], ks[3], 64, 32)
    w3, b3 = lin(ks[4], ks[5], 32, 1)
    return {"w1": w1, "b1": b1, "w2": w2, "b2": b2, "w3": w3, "b3": b3}


if __name__ == "__main__":
    key = jax.random.PRNGKey(0)
    pkey, xkey = jax.random.split(key)
    params = init_params(pkey)
    prepped = prepare_params(params)

    batch = 8
    x = jax.random.normal(xkey, (batch, 10), jnp.float32)

    out = simple_nn_forward(x, prepped)
    out = jax.block_until_ready(out)

    # Pure-JAX reference (same semantics as the PyTorch module forward).
    def ref(x, p):
        h = jnp.maximum(x @ p["w1"].T + p["b1"], 0.0)
        h = jnp.maximum(h @ p["w2"].T + p["b2"], 0.0)
        return h @ p["w3"].T + p["b3"]

    expected = ref(x, params)
    assert out.shape == (batch, 1)
    assert jnp.allclose(out, expected, atol=1e-5, rtol=1e-5), (
        float(jnp.max(jnp.abs(out - expected))))
    print("KERNEL_OK")
</pallas_src>

<mosaic_0001>
module attributes {stable_mosaic.version = 11 : i64} {
  func.func @mlp_kernel(%arg0: i32, %arg1: memref<128x10xf32, #tpu.memory_space<vmem>>, %arg2: memref<64x10xf32, #tpu.memory_space<vmem>>, %arg3: memref<64x1xf32, #tpu.memory_space<vmem>>, %arg4: memref<32x64xf32, #tpu.memory_space<vmem>>, %arg5: memref<32x1xf32, #tpu.memory_space<vmem>>, %arg6: memref<1x32xf32, #tpu.memory_space<vmem>>, %arg7: memref<1xf32, #tpu.memory_space<smem>>, %arg8: memref<1x128xf32, #tpu.memory_space<vmem>>) attributes {dimension_semantics = [#tpu.dimension_semantics<parallel>], iteration_bounds = array<i64: 1>, scalar_prefetch = 0 : i64, scratch_operands = 0 : i64, tpu.core_type = #tpu.core_type<tc>, window_params = [{transform_indices = @transform_0, window_bounds = array<i64: 128, 10>}, {pipeline_mode = #tpu.pipeline_mode<synchronous>, transform_indices = @transform_1, window_bounds = array<i64: 64, 10>}, {pipeline_mode = #tpu.pipeline_mode<synchronous>, transform_indices = @transform_2, window_bounds = array<i64: 64, 1>}, {pipeline_mode = #tpu.pipeline_mode<synchronous>, transform_indices = @transform_3, window_bounds = array<i64: 32, 64>}, {pipeline_mode = #tpu.pipeline_mode<synchronous>, transform_indices = @transform_4, window_bounds = array<i64: 32, 1>}, {pipeline_mode = #tpu.pipeline_mode<synchronous>, transform_indices = @transform_5, window_bounds = array<i64: 1, 32>}, {transform_indices = @transform_6, window_bounds = array<i64: 1>}, {transform_indices = @transform_7, window_bounds = array<i64: 1, 128>}]} {
    %c0 = arith.constant 0 : index
    %c0_0 = arith.constant 0 : index
    %0 = vector.load %arg2[%c0, %c0_0] : memref<64x10xf32, #tpu.memory_space<vmem>>, vector<64x10xf32>
    %c0_1 = arith.constant 0 : index
    %c0_2 = arith.constant 0 : index
    %1 = vector.load %arg3[%c0_1, %c0_2] : memref<64x1xf32, #tpu.memory_space<vmem>>, vector<64x1xf32>
    %c0_3 = arith.constant 0 : index
    %c0_4 = arith.constant 0 : index
    %2 = vector.load %arg4[%c0_3, %c0_4] : memref<32x64xf32, #tpu.memory_space<vmem>>, vector<32x64xf32>
    %c0_5 = arith.constant 0 : index
    %c0_6 = arith.constant 0 : index
    %3 = vector.load %arg5[%c0_5, %c0_6] : memref<32x1xf32, #tpu.memory_space<vmem>>, vector<32x1xf32>
    %c0_7 = arith.constant 0 : index
    %c0_8 = arith.constant 0 : index
    %4 = vector.load %arg6[%c0_7, %c0_8] : memref<1x32xf32, #tpu.memory_space<vmem>>, vector<1x32xf32>
    %c0_9 = arith.constant 0 : index
    %5 = memref.load %arg7[%c0_9] : memref<1xf32, #tpu.memory_space<smem>>
    %c0_i32 = arith.constant 0 : i32
    %c128_i32 = arith.constant 128 : i32
    %6 = arith.muli %c0_i32, %c128_i32 : i32
    %7 = tpu.assume_multiple %6, 128 : i32
    %8 = arith.index_cast %7 : i32 to index
    %c0_10 = arith.constant 0 : index
    %9 = vector.load %arg1[%8, %c0_10] : memref<128x10xf32, #tpu.memory_space<vmem>>, vector<128x10xf32>
    %cst = arith.constant dense<0.000000e+00> : vector<64x128xf32>
    %10 = tpu.matmul %0, %9, %cst {dimension_numbers = #tpu.dot_dimension_numbers<[1], [1], [0], [0], [0, 0, 1, 0], [], []>} : vector<64x10xf32>, vector<128x10xf32>, vector<64x128xf32> -> vector<64x128xf32>
    %11 = vector.broadcast %1 : vector<64x1xf32> to vector<64x128xf32>
    %12 = arith.addf %10, %11 : vector<64x128xf32>
    %cst_11 = arith.constant 0.000000e+00 : f32
    %13 = vector.broadcast %cst_11 : f32 to vector<64x128xf32>
    %14 = arith.maximumf %12, %13 : vector<64x128xf32>
    %cst_12 = arith.constant dense<0.000000e+00> : vector<32x128xf32>
    %15 = tpu.matmul %2, %14, %cst_12 {dimension_numbers = #tpu.dot_dimension_numbers<[1], [0], [0], [1], [0, 0, 1, 1], [], []>} : vector<32x64xf32>, vector<64x128xf32>, vector<32x128xf32> -> vector<32x128xf32>
    %16 = vector.broadcast %3 : vector<32x1xf32> to vector<32x128xf32>
    %17 = arith.addf %15, %16 : vector<32x128xf32>
    %cst_13 = arith.constant 0.000000e+00 : f32
    %18 = vector.broadcast %cst_13 : f32 to vector<32x128xf32>
    %19 = arith.maximumf %17, %18 : vector<32x128xf32>
    %cst_14 = arith.constant dense<0.000000e+00> : vector<1x128xf32>
    %20 = tpu.matmul %4, %19, %cst_14 {dimension_numbers = #tpu.dot_dimension_numbers<[1], [0], [0], [1], [0, 0, 1, 1], [], []>} : vector<1x32xf32>, vector<32x128xf32>, vector<1x128xf32> -> vector<1x128xf32>
    %21 = vector.broadcast %5 : f32 to vector<1x128xf32>
    %22 = arith.addf %20, %21 : vector<1x128xf32>
    %c0_15 = arith.constant 0 : index
    %23 = arith.index_cast %7 : i32 to index
    %24 = vector.load %arg8[%c0_15, %23] : memref<1x128xf32, #tpu.memory_space<vmem>>, vector<1x128xf32>
    tpu.vector_store %arg8[%c0_15, %23], %22 {strides = array<i32>} : memref<1x128xf32, #tpu.memory_space<vmem>>, vector<1x128xf32>,
    %c1_i32 = arith.constant 1 : i32
    return
  }
  func.func @transform_0(%arg0: i32) -> (i32, i32) {
    %c0_i32 = arith.constant 0 : i32
    %c0_i32_0 = arith.constant 0 : i32
    return %arg0, %c0_i32 : i32, i32
  }
  func.func @transform_1(%arg0: i32) -> (i32, i32) {
    %c0_i32 = arith.constant 0 : i32
    %c0_i32_0 = arith.constant 0 : i32
    %c0_i32_1 = arith.constant 0 : i32
    return %c0_i32, %c0_i32_0 : i32, i32
  }
  func.func @transform_2(%arg0: i32) -> (i32, i32) {
    %c0_i32 = arith.constant 0 : i32
    %c0_i32_0 = arith.constant 0 : i32
    %c0_i32_1 = arith.constant 0 : i32
    return %c0_i32, %c0_i32_0 : i32, i32
  }
  func.func @transform_3(%arg0: i32) -> (i32, i32) {
    %c0_i32 = arith.constant 0 : i32
    %c0_i32_0 = arith.constant 0 : i32
    %c0_i32_1 = arith.constant 0 : i32
    return %c0_i32, %c0_i32_0 : i32, i32
  }
  func.func @transform_4(%arg0: i32) -> (i32, i32) {
    %c0_i32 = arith.constant 0 : i32
    %c0_i32_0 = arith.constant 0 : i32
    %c0_i32_1 = arith.constant 0 : i32
    return %c0_i32, %c0_i32_0 : i32, i32
  }
  func.func @transform_5(%arg0: i32) -> (i32, i32) {
    %c0_i32 = arith.constant 0 : i32
    %c0_i32_0 = arith.constant 0 : i32
    %c0_i32_1 = arith.constant 0 : i32
    return %c0_i32, %c0_i32_0 : i32, i32
  }
  func.func @transform_6(%arg0: i32) -> i32 {
    %c0_i32 = arith.constant 0 : i32
    %c0_i32_0 = arith.constant 0 : i32
    return %c0_i32 : i32
  }
  func.func @transform_7(%arg0: i32) -> (i32, i32) {
    %c0_i32 = arith.constant 0 : i32
    %c0_i32_0 = arith.constant 0 : i32
    return %c0_i32, %arg0 : i32, i32
  }
}

</mosaic_0001>

<llo_original>
// kernel: simple_nn_forward.1
$region0: #{simple_nn_forward.1}
  #allocation0 [shape = 'u32[]', space=smem, size = 0x4, offset = 0x4, fixed_abs, tag = 'smem constant byte address 0x4 - core index']
  #allocation1 [shape = 'u32[144,128]{1,0:T(1,128)}', space=vmem, size = 0x12000, scoped, tag = 'internal scratch']
  #allocation2 [shape = 'f32[1]{0:T(128)S(6)}', space=smem, size = 0x200, scoped, tag = 'scoped memory for simple_nn_forward.1']
  %s0 = inlined_call_operand.vmem [shape: f32[128,10], index: 0, kind: input, shape index: {}]
  %s1 = inlined_call_operand.vmem [shape: f32[64,10], index: 1, kind: input, shape index: {}]
  %s2 = inlined_call_operand.vmem [shape: f32[64,1], index: 2, kind: input, shape index: {}]
  %s3 = inlined_call_operand.vmem [shape: f32[32,64], index: 3, kind: input, shape index: {}]
  %s4 = inlined_call_operand.vmem [shape: f32[32,1], index: 4, kind: input, shape index: {}]
  %s5 = inlined_call_operand.vmem [shape: f32[1,32], index: 5, kind: input, shape index: {}]
  %s6 = inlined_call_operand.<no memory space> [shape: f32[1], index: 6, kind: input, shape index: {}]
  %s7 = inlined_call_operand.vmem [shape: f32[1,128], index: 7, kind: output, shape index: {}]
  %s8 = sld [smem:[#allocation0]]
  $region38: #{simple_nn_forward.1} parent=0
    _
  %s10 = ssub.s32 1, %s8
  %s11 = scalar_select 0, %s10, %s8
  %12 = sst [smem:[#allocation2]] %s6
  // Predicated region
  $region2: #{simple_nn_forward.1} parent=0 // pred_check
    _
  $region3: #{simple_nn_forward.1} parent=0 // pred_check_branch
    %14 = sbr.rel (0) target = $region5
  $region4: #{simple_nn_forward.1} parent=0 // pred_region
    _
  $region5: #{simple_nn_forward.1} parent=0 // pred_fallthru
    _
  // Predicated region
  $region6: #{simple_nn_forward.1} parent=0 // pred_check
    _
  $region7: #{simple_nn_forward.1} parent=0 // pred_check_branch
    %16 = sbr.rel (0) target = $region9
  $region8: #{simple_nn_forward.1} parent=0 // pred_region
    _
  $region9: #{simple_nn_forward.1} parent=0 // pred_fallthru
    _
  // Predicated region
  $region10: #{simple_nn_forward.1} parent=0 // pred_check
    _
  $region11: #{simple_nn_forward.1} parent=0 // pred_check_branch
    %18 = sbr.rel (0) target = $region13
  $region12: #{simple_nn_forward.1} parent=0 // pred_region
    _
  $region13: #{simple_nn_forward.1} parent=0 // pred_fallthru
    _
  // Predicated region
  $region14: #{simple_nn_forward.1} parent=0 // pred_check
    _
  $region15: #{simple_nn_forward.1} parent=0 // pred_check_branch
    %20 = sbr.rel (0) target = $region17
  $region16: #{simple_nn_forward.1} parent=0 // pred_region
    _
  $region17: #{simple_nn_forward.1} parent=0 // pred_fallthru
    _
  // Predicated region
  $region18: #{simple_nn_forward.1} parent=0 // pred_check
    _
  $region19: #{simple_nn_forward.1} parent=0 // pred_check_branch
    %22 = sbr.rel (0) target = $region21
  $region20: #{simple_nn_forward.1} parent=0 // pred_region
    _
  $region21: #{simple_nn_forward.1} parent=0 // pred_fallthru
    _
  // Predicated region
  $region22: #{simple_nn_forward.1} parent=0 // pred_check
    _
  $region23: #{simple_nn_forward.1} parent=0 // pred_check_branch
    %24 = sbr.rel (0) target = $region25
  $region24: #{simple_nn_forward.1} parent=0 // pred_region
    _
  $region25: #{simple_nn_forward.1} parent=0 // pred_fallthru
    _
  // Predicated region
  $region26: #{simple_nn_forward.1} parent=0 // pred_check
    _
  $region27: #{simple_nn_forward.1} parent=0 // pred_check_branch
    %26 = sbr.rel (0) target = $region29
  $region28: #{simple_nn_forward.1} parent=0 // pred_region
    _
  $region29: #{simple_nn_forward.1} parent=0 // pred_fallthru
    _
  %v27 = vld [vmem:[%s1] sm:$0xff]
  %v28 = vld [vmem:[%s1 + $0x8] sm:$0xff]
  %v29 = vld [vmem:[%s1 + $0x10] sm:$0xff]
  %v30 = vld [vmem:[%s1 + $0x18] sm:$0xff]
  %v31 = vld [vmem:[%s1 + $0x20] sm:$0xff]
  %v32 = vld [vmem:[%s1 + $0x28] sm:$0xff]
  %v33 = vld [vmem:[%s1 + $0x30] sm:$0xff]
  %v34 = vld [vmem:[%s1 + $0x38] sm:$0xff]
  %v35 = vld [vmem:[%s2] sm:$0xff]
  %v36 = vld [vmem:[%s2 + $0x8] sm:$0xff]
  %v37 = vld [vmem:[%s2 + $0x10] sm:$0xff]
  %v38 = vld [vmem:[%s2 + $0x18] sm:$0xff]
  %v39 = vld [vmem:[%s2 + $0x20] sm:$0xff]
  %v40 = vld [vmem:[%s2 + $0x28] sm:$0xff]
  %v41 = vld [vmem:[%s2 + $0x30] sm:$0xff]
  %v42 = vld [vmem:[%s2 + $0x38] sm:$0xff]
  %v43 = vld [vmem:[%s3] sm:$0xff]
  %v44 = vld [vmem:[%s3 + $0x8] sm:$0xff]
  %v45 = vld [vmem:[%s3 + $0x10] sm:$0xff]
  %v46 = vld [vmem:[%s3 + $0x18] sm:$0xff]
  %v47 = vld [vmem:[%s4] sm:$0xff]
  %v48 = vld [vmem:[%s4 + $0x8] sm:$0xff]
  %v49 = vld [vmem:[%s4 + $0x10] sm:$0xff]
  %v50 = vld [vmem:[%s4 + $0x18] sm:$0xff]
  %v51 = vld [vmem:[%s5] sm:$0x1]
  %s52 = sld [smem:[#allocation2]]
  %v53 = vld [vmem:[%s0] sm:$0xff]
  %v54 = vld [vmem:[%s0 + $0x8] sm:$0xff]
  %v55 = vld [vmem:[%s0 + $0x10] sm:$0xff]
  %v56 = vld [vmem:[%s0 + $0x18] sm:$0xff]
  %v57 = vld [vmem:[%s0 + $0x20] sm:$0xff]
  %v58 = vld [vmem:[%s0 + $0x28] sm:$0xff]
  %v59 = vld [vmem:[%s0 + $0x30] sm:$0xff]
  %v60 = vld [vmem:[%s0 + $0x38] sm:$0xff]
  %v61 = vld [vmem:[%s0 + $0x40] sm:$0xff]
  %v62 = vld [vmem:[%s0 + $0x48] sm:$0xff]
  %v63 = vld [vmem:[%s0 + $0x50] sm:$0xff]
  %v64 = vld [vmem:[%s0 + $0x58] sm:$0xff]
  %v65 = vld [vmem:[%s0 + $0x60] sm:$0xff]
  %v66 = vld [vmem:[%s0 + $0x68] sm:$0xff]
  %v67 = vld [vmem:[%s0 + $0x70] sm:$0xff]
  %v68 = vld [vmem:[%s0 + $0x78] sm:$0xff]
  %70 = vset.pattern.permute.xlu0 0
  %71 = vperm.xlu0 %70, %v35
  %v72 = vpop.permute.xlu0 %71
  %75 = vset.pattern.permute.xlu0 0
  %76 = vperm.xlu0 %75, %v36
  %v77 = vpop.permute.xlu0 %76
  %80 = vset.pattern.permute.xlu0 0
  %81 = vperm.xlu0 %80, %v37
  %v82 = vpop.permute.xlu0 %81
  %85 = vset.pattern.permute.xlu0 0
  %86 = vperm.xlu0 %85, %v38
  %v87 = vpop.permute.xlu0 %86
  %90 = vset.pattern.permute.xlu0 0
  %91 = vperm.xlu0 %90, %v39
  %v92 = vpop.permute.xlu0 %91
  %95 = vset.pattern.permute.xlu0 0
  %96 = vperm.xlu0 %95, %v40
  %v97 = vpop.permute.xlu0 %96
  %100 = vset.pattern.permute.xlu0 0
  %101 = vperm.xlu0 %100, %v41
  %v102 = vpop.permute.xlu0 %101
  %105 = vset.pattern.permute.xlu0 0
  %106 = vperm.xlu0 %105, %v42
  %v107 = vpop.permute.xlu0 %106
  %vm109 = vcmask 80896
  %v111 = vsel %vm109, %v27, 0
  %v114 = vsel %vm109, %v28, 0
  %v117 = vsel %vm109, %v29, 0
  %v120 = vsel %vm109, %v30, 0
  %v123 = vsel %vm109, %v31, 0
  %v126 = vsel %vm109, %v32, 0
  %v129 = vsel %vm109, %v33, 0
  %v132 = vsel %vm109, %v34, 0
  %v135 = vsel %vm109, %v53, 0
  %v138 = vsel %vm109, %v54, 0
  %v141 = vsel %vm109, %v55, 0
  %v144 = vsel %vm109, %v56, 0
  %v147 = vsel %vm109, %v57, 0
  %v150 = vsel %vm109, %v58, 0
  %v153 = vsel %vm109, %v59, 0
  %v156 = vsel %vm109, %v60, 0
  %v159 = vsel %vm109, %v61, 0
  %v162 = vsel %vm109, %v62, 0
  %v165 = vsel %vm109, %v63, 0
  %v168 = vsel %vm109, %v64, 0
  %v171 = vsel %vm109, %v65, 0
  %v174 = vsel %vm109, %v66, 0
  %v177 = vsel %vm109, %v67, 0
  %v180 = vsel %vm109, %v68, 0
  %182 = vmatprep.subr.mxu0 0.0
  %183 = vmatpush1.xpose.msra.mxu0 %v135
  %184 = vmatprep.subr.mxu0 0.0
  %185 = vmatpush1.xpose.msra.mxu0 %v138
  %186 = vmatprep.subr.mxu0 0.0
  %187 = vmatpush1.xpose.msra.mxu0 %v141
  %188 = vmatprep.subr.mxu0 0.0
  %189 = vmatpush1.xpose.msra.mxu0 %v144
  %190 = vmatprep.subr.mxu0 0.0
  %191 = vmatpush1.xpose.msra.mxu0 %v147
  %192 = vmatprep.subr.mxu0 0.0
  %193 = vmatpush1.xpose.msra.mxu0 %v150
  %194 = vmatprep.subr.mxu0 0.0
  %195 = vmatpush1.xpose.msra.mxu0 %v153
  %196 = vmatprep.subr.mxu0 0.0
  %197 = vmatpush1.xpose.msra.mxu0 %v156
  %198 = vmatprep.subr.mxu0 0.0
  %199 = vmatpush1.xpose.msra.mxu0 %v159
  %200 = vmatprep.subr.mxu0 0.0
  %201 = vmatpush1.xpose.msra.mxu0 %v162
  %202 = vmatprep.subr.mxu0 0.0
  %203 = vmatpush1.xpose.msra.mxu0 %v165
  %204 = vmatprep.subr.mxu0 0.0
  %205 = vmatpush1.xpose.msra.mxu0 %v168
  %206 = vmatprep.subr.mxu0 0.0
  %207 = vmatpush1.xpose.msra.mxu0 %v171
  %208 = vmatprep.subr.mxu0 0.0
  %209 = vmatpush1.xpose.msra.mxu0 %v174
  %210 = vmatprep.subr.mxu0 0.0
  %211 = vmatpush1.xpose.msra.mxu0 %v177
  %212 = vmatprep.subr.mxu0 0.0
  %213 = vmatpush1.xpose.msra.mxu0 %v180
  %214 = vmatprep.subr.mxu0 0.0
  %215 = vmatpush1.xpose.msra.mxu0 0.0
  %216 = vmatprep.subr.mxu0 0.0
  %217 = vmatpush1.xpose.msra.mxu0 0.0
  %218 = vmatprep.subr.mxu0 0.0
  %219 = vmatpush1.xpose.msra.mxu0 0.0
  %220 = vmatprep.subr.mxu0 0.0
  %221 = vmatpush1.xpose.msra.mxu0 0.0
  %222 = vmatprep.subr.mxu0 0.0
  %223 = vmatpush1.xpose.msra.mxu0 0.0
  %224 = vmatprep.subr.mxu0 0.0
  %225 = vmatpush1.xpose.msra.mxu0 0.0
  %226 = vmatprep.subr.mxu0 0.0
  %227 = vmatpush1.xpose.msra.mxu0 0.0
  %228 = vmatprep.subr.mxu0 0.0
  %229 = vmatpush1.xpose.msra.mxu0 0.0
  %230 = vmatprep.subr.mxu0 0.0
  %231 = vmatpush1.xpose.msra.mxu0 0.0
  %232 = vmatprep.subr.mxu0 0.0
  %233 = vmatpush1.xpose.msra.mxu0 0.0
  %234 = vmatprep.subr.mxu0 0.0
  %235 = vmatpush1.xpose.msra.mxu0 0.0
  %236 = vmatprep.subr.mxu0 0.0
  %237 = vmatpush1.xpose.msra.mxu0 0.0
  %238 = vmatprep.subr.mxu0 0.0
  %239 = vmatpush1.xpose.msra.mxu0 0.0
  %240 = vmatprep.subr.mxu0 0.0
  %241 = vmatpush1.xpose.msra.mxu0 0.0
  %242 = vmatprep.subr.mxu0 0.0
  %243 = vmatpush1.xpose.msra.mxu0 0.0
  %244 = vmatprep.subr.mxu0 0.0
  %245 = vmatpush1.xpose.msra.mxu0 0.0
  %246 = vmatprep.mubr.f32.mxu0 0.0
  %247 = vmatmul.mubr.f32.gmra.mrb[0].mxu0 %v111
  %v248 = vpop.f32.mrb[0].mxu0
  %v249 = vadd.f32 %v72, %v248
  %v250 = vpop.f32.mrb[0].mxu0
  %251 = vmatprep.mubr.f32.mxu0 0.0
  %252 = vmatmul.mubr.f32.gmra.mrb[0].mxu0 %v114
  %v253 = vpop.f32.mrb[0].mxu0
  %v254 = vadd.f32 %v77, %v253
  %v255 = vpop.f32.mrb[0].mxu0
  %256 = vmatprep.mubr.f32.mxu0 0.0
  %257 = vmatmul.mubr.f32.gmra.mrb[0].mxu0 %v117
  %v258 = vpop.f32.mrb[0].mxu0
  %v259 = vadd.f32 %v82, %v258
  %v260 = vpop.f32.mrb[0].mxu0
  %261 = vmatprep.mubr.f32.mxu0 0.0
  %262 = vmatmul.mubr.f32.gmra.mrb[0].mxu0 %v120
  %v263 = vpop.f32.mrb[0].mxu0
  %v264 = vadd.f32 %v87, %v263
  %v265 = vpop.f32.mrb[0].mxu0
  %266 = vmatprep.mubr.f32.mxu0 0.0
  %267 = vmatmul.mubr.f32.gmra.mrb[0].mxu0 %v123
  %v268 = vpop.f32.mrb[0].mxu0
  %v269 = vadd.f32 %v92, %v268
  %v270 = vpop.f32.mrb[0].mxu0
  %271 = vmatprep.mubr.f32.mxu0 0.0
  %272 = vmatmul.mubr.f32.gmra.mrb[0].mxu0 %v126
  %v273 = vpop.f32.mrb[0].mxu0
  %v274 = vadd.f32 %v97, %v273
  %v275 = vpop.f32.mrb[0].mxu0
  %276 = vmatprep.mubr.f32.mxu0 0.0
  %277 = vmatmul.mubr.f32.gmra.mrb[0].mxu0 %v129
  %v278 = vpop.f32.mrb[0].mxu0
  %v279 = vadd.f32 %v102, %v278
  %v280 = vpop.f32.mrb[0].mxu0
  %281 = vmatprep.mubr.f32.mxu0 0.0
  %282 = vmatmul.mubr.f32.gmra.mrb[0].mxu0 %v132
  %v283 = vpop.f32.mrb[0].mxu0
  %v284 = vadd.f32 %v107, %v283
  %v285 = vpop.f32.mrb[0].mxu0
  %286 = vdwg.mxu0
  %v287 = vmax.f32 %v249, 0.0
  %v288 = vmax.f32 %v254, 0.0
  %v289 = vmax.f32 %v259, 0.0
  %v290 = vmax.f32 %v264, 0.0
  %v291 = vmax.f32 %v269, 0.0
  %v292 = vmax.f32 %v274, 0.0
  %v293 = vmax.f32 %v279, 0.0
  %v294 = vmax.f32 %v284, 0.0
  %296 = vset.pattern.permute.xlu0 0
  %297 = vperm.xlu0 %296, %v47
  %v298 = vpop.permute.xlu0 %297
  %301 = vset.pattern.permute.xlu0 0
  %302 = vperm.xlu0 %301, %v48
  %v303 = vpop.permute.xlu0 %302
  %306 = vset.pattern.permute.xlu0 0
  %307 = vperm.xlu0 %306, %v49
  %v308 = vpop.permute.xlu0 %307
  %311 = vset.pattern.permute.xlu0 0
  %312 = vperm.xlu0 %311, %v50
  %v313 = vpop.permute.xlu0 %312
  %vm315 = vcmask 523264
  %v317 = vsel %vm315, %v43, 0
  %v320 = vsel %vm315, %v44, 0
  %v323 = vsel %vm315, %v45, 0
  %v326 = vsel %vm315, %v46, 0
  %328 = vmatprep.subr.mxu0 0.0
  %329 = vmatpush1.msra.mxu0 %v287
  %330 = vmatprep.subr.mxu0 0.0
  %331 = vmatpush1.msra.mxu0 %v288
  %332 = vmatprep.subr.mxu0 0.0
  %333 = vmatpush1.msra.mxu0 %v289
  %334 = vmatprep.subr.mxu0 0.0
  %335 = vmatpush1.msra.mxu0 %v290
  %336 = vmatprep.subr.mxu0 0.0
  %337 = vmatpush1.msra.mxu0 %v291
  %338 = vmatprep.subr.mxu0 0.0
  %339 = vmatpush1.msra.mxu0 %v292
  %340 = vmatprep.subr.mxu0 0.0
  %341 = vmatpush1.msra.mxu0 %v293
  %342 = vmatprep.subr.mxu0 0.0
  %343 = vmatpush1.msra.mxu0 %v294
  %344 = vmatprep.subr.mxu0 0.0
  %345 = vmatpush1.msra.mxu0 0.0
  %346 = vmatprep.subr.mxu0 0.0
  %347 = vmatpush1.msra.mxu0 0.0
  %348 = vmatprep.subr.mxu0 0.0
  %349 = vmatpush1.msra.mxu0 0.0
  %350 = vmatprep.subr.mxu0 0.0
  %351 = vmatpush1.msra.mxu0 0.0
  %352 = vmatprep.subr.mxu0 0.0
  %353 = vmatpush1.msra.mxu0 0.0
  %354 = vmatprep.subr.mxu0 0.0
  %355 = vmatpush1.msra.mxu0 0.0
  %356 = vmatprep.subr.mxu0 0.0
  %357 = vmatpush1.msra.mxu0 0.0
  %358 = vmatprep.subr.mxu0 0.0
  %359 = vmatpush1.msra.mxu0 0.0
  %360 = vmatprep.subr.mxu0 0.0
  %361 = vmatpush1.msra.mxu0 0.0
  %362 = vmatprep.subr.mxu0 0.0
  %363 = vmatpush1.msra.mxu0 0.0
  %364 = vmatprep.subr.mxu0 0.0
  %365 = vmatpush1.msra.mxu0 0.0
  %366 = vmatprep.subr.mxu0 0.0
  %367 = vmatpush1.msra.mxu0 0.0
  %368 = vmatprep.subr.mxu0 0.0
  %369 = vmatpush1.msra.mxu0 0.0
  %370 = vmatprep.subr.mxu0 0.0
  %371 = vmatpush1.msra.mxu0 0.0
  %372 = vmatprep.subr.mxu0 0.0
  %373 = vmatpush1.msra.mxu0 0.0
  %374 = vmatprep.subr.mxu0 0.0
  %375 = vmatpush1.msra.mxu0 0.0
  %376 = vmatprep.subr.mxu0 0.0
  %377 = vmatpush1.msra.mxu0 0.0
  %378 = vmatprep.subr.mxu0 0.0
  %379 = vmatpush1.msra.mxu0 0.0
  %380 = vmatprep.subr.mxu0 0.0
  %381 = vmatpush1.msra.mxu0 0.0
  %382 = vmatprep.subr.mxu0 0.0
  %383 = vmatpush1.msra.mxu0 0.0
  %384 = vmatprep.subr.mxu0 0.0
  %385 = vmatpush1.msra.mxu0 0.0
  %386 = vmatprep.subr.mxu0 0.0
  %387 = vmatpush1.msra.mxu0 0.0
  %388 = vmatprep.subr.mxu0 0.0
  %389 = vmatpush1.msra.mxu0 0.0
  %390 = vmatprep.subr.mxu0 0.0
  %391 = vmatpush1.msra.mxu0 0.0
  %392 = vmatprep.mubr.f32.mxu0 0.0
  %393 = vmatmul.mubr.f32.gmra.mrb[0].mxu0 %v317
  %v394 = vpop.f32.mrb[0].mxu0
  %v395 = vadd.f32 %v298, %v394
  %v396 = vpop.f32.mrb[0].mxu0
  %397 = vmatprep.mubr.f32.mxu0 0.0
  %398 = vmatmul.mubr.f32.gmra.mrb[0].mxu0 %v320
  %v399 = vpop.f32.mrb[0].mxu0
  %v400 = vadd.f32 %v303, %v399
  %v401 = vpop.f32.mrb[0].mxu0
  %402 = vmatprep.mubr.f32.mxu0 0.0
  %403 = vmatmul.mubr.f32.gmra.mrb[0].mxu0 %v323
  %v404 = vpop.f32.mrb[0].mxu0
  %v405 = vadd.f32 %v308, %v404
  %v406 = vpop.f32.mrb[0].mxu0
  %407 = vmatprep.mubr.f32.mxu0 0.0
  %408 = vmatmul.mubr.f32.gmra.mrb[0].mxu0 %v326
  %v409 = vpop.f32.mrb[0].mxu0
  %v410 = vadd.f32 %v313, %v409
  %v411 = vpop.f32.mrb[0].mxu0
  %412 = vdwg.mxu0
  %v413 = vmax.f32 %v395, 0.0
  %v414 = vmax.f32 %v400, 0.0
  %v415 = vmax.f32 %v405, 0.0
  %v416 = vmax.f32 %v410, 0.0
  %v417 = vstv %s52
  %vm418 = vcmask 261120
  %v420 = vsel %vm418, %v51, 0
  %422 = vmatprep.subr.mxu0 0.0
  %423 = vmatpush1.msra.mxu0 %v413
  %424 = vmatprep.subr.mxu0 0.0
  %425 = vmatpush1.msra.mxu0 %v414
  %426 = vmatprep.subr.mxu0 0.0
  %427 = vmatpush1.msra.mxu0 %v415
  %428 = vmatprep.subr.mxu0 0.0
  %429 = vmatpush1.msra.mxu0 %v416
  %430 = vmatprep.subr.mxu0 0.0
  %431 = vmatpush1.msra.mxu0 0.0
  %432 = vmatprep.subr.mxu0 0.0
  %433 = vmatpush1.msra.mxu0 0.0
  %434 = vmatprep.subr.mxu0 0.0
  %435 = vmatpush1.msra.mxu0 0.0
  %436 = vmatprep.subr.mxu0 0.0
  %437 = vmatpush1.msra.mxu0 0.0
  %438 = vmatprep.subr.mxu0 0.0
  %439 = vmatpush1.msra.mxu0 0.0
  %440 = vmatprep.subr.mxu0 0.0
  %441 = vmatpush1.msra.mxu0 0.0
  %442 = vmatprep.subr.mxu0 0.0
  %443 = vmatpush1.msra.mxu0 0.0
  %444 = vmatprep.subr.mxu0 0.0
  %445 = vmatpush1.msra.mxu0 0.0
  %446 = vmatprep.subr.mxu0 0.0
  %447 = vmatpush1.msra.mxu0 0.0
  %448 = vmatprep.subr.mxu0 0.0
  %449 = vmatpush1.msra.mxu0 0.0
  %450 = vmatprep.subr.mxu0 0.0
  %451 = vmatpush1.msra.mxu0 0.0
  %452 = vmatprep.subr.mxu0 0.0
  %453 = vmatpush1.msra.mxu0 0.0
  %454 = vmatprep.subr.mxu0 0.0
  %455 = vmatpush1.msra.mxu0 0.0
  %456 = vmatprep.subr.mxu0 0.0
  %457 = vmatpush1.msra.mxu0 0.0
  %458 = vmatprep.subr.mxu0 0.0
  %459 = vmatpush1.msra.mxu0 0.0
  %460 = vmatprep.subr.mxu0 0.0
  %461 = vmatpush1.msra.mxu0 0.0
  %462 = vmatprep.subr.mxu0 0.0
  %463 = vmatpush1.msra.mxu0 0.0
  %464 = vmatprep.subr.mxu0 0.0
  %465 = vmatpush1.msra.mxu0 0.0
  %466 = vmatprep.subr.mxu0 0.0
  %467 = vmatpush1.msra.mxu0 0.0
  %468 = vmatprep.subr.mxu0 0.0
  %469 = vmatpush1.msra.mxu0 0.0
  %470 = vmatprep.subr.mxu0 0.0
  %471 = vmatpush1.msra.mxu0 0.0
  %472 = vmatprep.subr.mxu0 0.0
  %473 = vmatpush1.msra.mxu0 0.0
  %474 = vmatprep.subr.mxu0 0.0
  %475 = vmatpush1.msra.mxu0 0.0
  %476 = vmatprep.subr.mxu0 0.0
  %477 = vmatpush1.msra.mxu0 0.0
  %478 = vmatprep.subr.mxu0 0.0
  %479 = vmatpush1.msra.mxu0 0.0
  %480 = vmatprep.subr.mxu0 0.0
  %481 = vmatpush1.msra.mxu0 0.0
  %482 = vmatprep.subr.mxu0 0.0
  %483 = vmatpush1.msra.mxu0 0.0
  %484 = vmatprep.subr.mxu0 0.0
  %485 = vmatpush1.msra.mxu0 0.0
  %486 = vmatprep.mubr.f32.mxu0 0.0
  %487 = vmatmul.mubr.f32.gmra.mrb[0].mxu0 %v420
  %v488 = vpop.f32.mrb[0].mxu0
  %v489 = vadd.f32 %v417, %v488
  %v490 = vpop.f32.mrb[0].mxu0
  %491 = vdwg.mxu0
  %492 = vst [vmem:[%s7] sm:$0x1] %v489
  // Predicated region
  $region30: #{simple_nn_forward.1} parent=0 // pred_check
    _
  $region31: #{simple_nn_forward.1} parent=0 // pred_check_branch
    %494 = sbr.rel (0) target = $region33
  $region32: #{simple_nn_forward.1} parent=0 // pred_region
    _
  $region33: #{simple_nn_forward.1} parent=0 // pred_fallthru
    _
  // Predicated region
  $region34: #{simple_nn_forward.1} parent=0 // pred_check
    _
  $region35: #{simple_nn_forward.1} parent=0 // pred_check_branch
    %496 = sbr.rel (0) target = $region37
  $region36: #{simple_nn_forward.1} parent=0 // pred_region
    _
  $region37: #{simple_nn_forward.1} parent=0 // pred_fallthru
    _

</llo_original>
